<compile_context>
chip_gen: v5e
topology: v5e:2x2
jax: 0.10.0
libtpu: 0.0.40
codegen_flags: <defaults>
</compile_context>

<pallas_src>
import functools

import jax
import jax.numpy as jnp
import numpy as np
from jax.experimental import pallas as pl
from jax.experimental.pallas import tpu as pltpu


# ----------------------------- Pallas kernel ------------------------------- #

def _sph_kernel(q_ref, nbr_ref, o_ref, *, k, use_pu):
    """One lane-major tile of query points: SPH message + 'add' aggregation.

    q_ref   : (2, TM)      packed query coords [x; y]
    nbr_ref : (4*K, TM)    packed gathered [xn; yn; 1/h; u]
    o_ref   : (1, TM)      lane-dense output
    """
    x = q_ref[0:1, :]                             # (1, TM)
    y = q_ref[1:2, :]                             # (1, TM)
    xn = nbr_ref[0 * k:1 * k, :]                  # (K, TM)
    yn = nbr_ref[1 * k:2 * k, :]                  # (K, TM)
    hinv = nbr_ref[2 * k:3 * k, :]                # (K, TM)  gathered 1/h_j
    u = nbr_ref[3 * k:4 * k, :]                   # (K, TM)  gathered u_j

    xh = (x - xn) * hinv                          # (K, TM)
    yh = (y - yn) * hinv                          # (K, TM)
    w = jnp.exp(-(xh * xh + yh * yh))             # (K, TM)  gaussian activation

    nr = jnp.sum(u * w, axis=0, keepdims=True)    # aggr='add' over neighbors
    if use_pu:
        dnr = jnp.sum(w, axis=0, keepdims=True)
        o_ref[...] = nr / dnr                     # keep the final divide exact
    else:
        o_ref[...] = nr


def sph_forward_pallas(x, y, nbr_packed, *, k, use_pu, tile_m=512):
    """x, y: (M,) query coords; nbr_packed: (4*K, M) gathered neighbor slab."""
    M = x.shape[0]
    LANE = 128

    # Lane-major tiling: queries on the lane axis, padded to a tile multiple.
    tile_m = max(LANE, (tile_m // LANE) * LANE)
    tile_m = min(tile_m, pl.cdiv(M, LANE) * LANE)     # don't over-pad tiny M
    m_pad = pl.cdiv(M, tile_m) * tile_m
    grid = (m_pad // tile_m,)

    # Zero padding in the extra lanes yields finite (0) outputs there, which
    # are sliced off below.
    nbr = jnp.pad(nbr_packed.astype(jnp.float32), ((0, 0), (0, m_pad - M)))
    q = jnp.pad(jnp.stack([x, y], axis=0).astype(jnp.float32),
                ((0, 0), (0, m_pad - M)))                  # (2, m_pad)

    kernel = functools.partial(_sph_kernel, k=k, use_pu=use_pu)
    cost = pl.CostEstimate(
        flops=10 * m_pad * k,
        transcendentals=m_pad * k,
        bytes_accessed=4 * (4 * k * m_pad + 3 * m_pad),
    )

    out = pl.pallas_call(
        kernel,
        out_shape=jax.ShapeDtypeStruct((1, m_pad), jnp.float32),
        grid_spec=pltpu.PrefetchScalarGridSpec(
            num_scalar_prefetch=0,
            grid=grid,
            in_specs=[
                pl.BlockSpec((2, tile_m), lambda i: (0, i)),         # [x; y]
                pl.BlockSpec((4 * k, tile_m), lambda i: (0, i)),     # packed nbrs
            ],
            out_specs=pl.BlockSpec((1, tile_m), lambda i: (0, i)),
        ),
        compiler_params=pltpu.CompilerParams(
            dimension_semantics=("parallel",)),
        cost_estimate=cost,
    )(q, nbr)
    return out[0, :M]


# ------------------------------ GConvNet glue ------------------------------ #

class GConvNetPallas:
    """JAX/Pallas port of GConvNet.forward (n_vars == 1, fixed_h=False)."""

    def __init__(self, points, f_points, u, *, use_pu=True, max_nbrs=32):
        # points: (n_free, 2), f_points: (n_fixed, 2), u: (n,)
        self.points = jnp.asarray(points, jnp.float32)
        self.f_points = jnp.asarray(f_points, jnp.float32)
        self.use_pu = use_pu
        self.max_nbrs = max_nbrs
        n_free, n_fixed = self.points.shape[0], self.f_points.shape[0]
        self.n = n_free + n_fixed
        all_x = np.concatenate([np.asarray(points)[:, 0],
                                np.asarray(f_points)[:, 0]])
        dsize = np.ptp(all_x)
        self.dx = float(dsize / np.sqrt(self.n))
        # fixed_h=False branch: h = dx * ones(n)  (trainable in torch; plain param here)
        self.h = jnp.full((self.n,), self.dx, jnp.float32)
        self.u = jnp.asarray(u, jnp.float32)            # (n,)

    def widths(self):
        return self.h

    def _knn(self, nodes, x, y):
        # TODO(synk): torch_cluster.knn + the data-dependent neighbor gather
        # stay in plain JAX (lax.top_k / jnp.take); only the SPH message +
        # aggregation runs in Pallas.  Tie-breaking order may differ from
        # torch_cluster, which does not affect the sum.
        dxm = x[:, None] - nodes[None, :, 0]
        dym = y[:, None] - nodes[None, :, 1]
        d2 = dxm * dxm + dym * dym                      # (M, N)
        _, idx = jax.lax.top_k(-d2, self.max_nbrs)      # (M, K)
        return idx

    def _gather_packed(self, nodes, idx):
        """Single fused gather: (4, N) attribute table -> (4*K, M) slab."""
        hinv = 1.0 / self.widths()                      # (N,) O(N) recip
        table = jnp.stack([nodes[:, 0], nodes[:, 1], hinv, self.u], axis=0)
        g = jnp.take(table, idx.T, axis=1)              # (4, K, M)
        K, M = idx.shape[1], idx.shape[0]
        return g.reshape(4 * K, M)

    def forward(self, x, y):
        nodes = jnp.vstack((self.points, self.f_points))     # (N, 2)
        idx = self._knn(nodes, x, y)                          # (M, K)
        nbr_packed = self._gather_packed(nodes, idx)          # (4*K, M)
        return sph_forward_pallas(x, y, nbr_packed,
                                  k=self.max_nbrs, use_pu=self.use_pu)

    # Pure-JAX reference for validation (same math, no Pallas).
    def forward_ref(self, x, y):
        nodes = jnp.vstack((self.points, self.f_points))
        idx = self._knn(nodes, x, y)
        hinv = 1.0 / self.widths()
        xn_g = jnp.take(nodes[:, 0], idx, axis=0)
        yn_g = jnp.take(nodes[:, 1], idx, axis=0)
        hinv_g = jnp.take(hinv, idx, axis=0)
        u_g = jnp.take(self.u, idx, axis=0)
        # (x - xn) * (1/h)  ==  (x - xn) / h  (algebraically identical).
        xh = (x[:, None] - xn_g) * hinv_g
        yh = (y[:, None] - yn_g) * hinv_g
        w = jnp.exp(-(xh * xh + yh * yh))
        nr = jnp.sum(u_g * w, axis=-1)
        dnr = jnp.sum(w, axis=-1) if self.use_pu else 1.0
        return nr / dnr


# --------------------------------- main ------------------------------------ #

if __name__ == "__main__":
    # Deterministic synthetic "pde": 7x7 interior (free) nodes + 32 boundary
    # (fixed) nodes on the unit square; n = 81.
    g = np.linspace(0.125, 0.875, 7)
    gx, gy = np.meshgrid(g, g)
    points = np.stack([gx.ravel(), gy.ravel()], axis=1)        # (49, 2) free

    bb = np.linspace(0.0, 1.0, 9)
    bot = np.stack([bb[:-1], np.zeros(8)], axis=1)
    right = np.stack([np.ones(8), bb[:-1]], axis=1)
    top = np.stack([bb[1:][::-1], np.ones(8)], axis=1)
    left = np.stack([np.zeros(8), bb[1:][::-1]], axis=1)
    f_points = np.concatenate([bot, right, top, left], axis=0)  # (32, 2) fixed

    n = points.shape[0] + f_points.shape[0]                     # 81

    key = jax.random.PRNGKey(0)
    ku, kx, ky = jax.random.split(key, 3)
    # Module initializes u to zeros; use small deterministic random values so
    # the output is non-trivial for testing.
    u = 0.1 * jax.random.normal(ku, (n,), dtype=jnp.float32)

    net = GConvNetPallas(points, f_points, u, use_pu=True, max_nbrs=32)

    M = 64  # number of query points (x, y)
    x = jax.random.uniform(kx, (M,), dtype=jnp.float32)
    y = jax.random.uniform(ky, (M,), dtype=jnp.float32)

    fwd = jax.jit(net.forward)
    out = jax.block_until_ready(fwd(x, y))
    ref = jax.block_until_ready(net.forward_ref(x, y))

    assert out.shape == (M,)
    np.testing.assert_allclose(np.asarray(out), np.asarray(ref),
                               rtol=1e-5, atol=1e-5)
    print("KERNEL_OK")
</pallas_src>

<mosaic_0001>
module attributes {stable_mosaic.version = 11 : i64} {
  func.func @_sph_kernel(%arg0: i32, %arg1: memref<2x128xf32, #tpu.memory_space<vmem>>, %arg2: memref<128x128xf32, #tpu.memory_space<vmem>>, %arg3: memref<1x128xf32, #tpu.memory_space<vmem>>) attributes {dimension_semantics = [#tpu.dimension_semantics<parallel>], iteration_bounds = array<i64: 1>, scalar_prefetch = 0 : i64, scratch_operands = 0 : i64, tpu.core_type = #tpu.core_type<tc>, window_params = [{transform_indices = @transform_0, window_bounds = array<i64: 2, 128>}, {transform_indices = @transform_1, window_bounds = array<i64: 128, 128>}, {transform_indices = @transform_2, window_bounds = array<i64: 1, 128>}]} {
    %c0 = arith.constant 0 : index
    %c0_0 = arith.constant 0 : index
    %0 = vector.load %arg1[%c0, %c0_0] : memref<2x128xf32, #tpu.memory_space<vmem>>, vector<1x128xf32>
    %c1 = arith.constant 1 : index
    %c0_1 = arith.constant 0 : index
    %1 = vector.load %arg1[%c1, %c0_1] : memref<2x128xf32, #tpu.memory_space<vmem>>, vector<1x128xf32>
    %c0_2 = arith.constant 0 : index
    %c0_3 = arith.constant 0 : index
    %2 = vector.load %arg2[%c0_2, %c0_3] : memref<128x128xf32, #tpu.memory_space<vmem>>, vector<32x128xf32>
    %c32 = arith.constant 32 : index
    %c0_4 = arith.constant 0 : index
    %3 = vector.load %arg2[%c32, %c0_4] : memref<128x128xf32, #tpu.memory_space<vmem>>, vector<32x128xf32>
    %c64 = arith.constant 64 : index
    %c0_5 = arith.constant 0 : index
    %4 = vector.load %arg2[%c64, %c0_5] : memref<128x128xf32, #tpu.memory_space<vmem>>, vector<32x128xf32>
    %c96 = arith.constant 96 : index
    %c0_6 = arith.constant 0 : index
    %5 = vector.load %arg2[%c96, %c0_6] : memref<128x128xf32, #tpu.memory_space<vmem>>, vector<32x128xf32>
    %6 = vector.broadcast %0 : vector<1x128xf32> to vector<32x128xf32>
    %7 = arith.subf %6, %2 : vector<32x128xf32>
    %8 = arith.mulf %7, %4 : vector<32x128xf32>
    %9 = vector.broadcast %1 : vector<1x128xf32> to vector<32x128xf32>
    %10 = arith.subf %9, %3 : vector<32x128xf32>
    %11 = arith.mulf %10, %4 : vector<32x128xf32>
    %12 = arith.mulf %8, %8 : vector<32x128xf32>
    %13 = arith.mulf %11, %11 : vector<32x128xf32>
    %14 = arith.addf %12, %13 : vector<32x128xf32>
    %cst = arith.constant 0.000000e+00 : f32
    %15 = vector.broadcast %cst : f32 to vector<32x128xf32>
    %16 = arith.subf %15, %14 : vector<32x128xf32>
    %17 = math.exp %16 : vector<32x128xf32>
    %18 = arith.mulf %5, %17 : vector<32x128xf32>
    %cst_7 = arith.constant dense<0.000000e+00> : vector<128xf32>
    %19 = vector.multi_reduction <add>, %18, %cst_7 [0] : vector<32x128xf32> to vector<128xf32>
    %20 = vector.shape_cast %19 : vector<128xf32> to vector<1x128xf32>
    %cst_8 = arith.constant dense<0.000000e+00> : vector<128xf32>
    %21 = vector.multi_reduction <add>, %17, %cst_8 [0] : vector<32x128xf32> to vector<128xf32>
    %22 = vector.shape_cast %21 : vector<128xf32> to vector<1x128xf32>
    %23 = arith.divf %20, %22 : vector<1x128xf32>
    %c0_9 = arith.constant 0 : index
    %c0_10 = arith.constant 0 : index
    %24 = vector.load %arg3[%c0_9, %c0_10] : memref<1x128xf32, #tpu.memory_space<vmem>>, vector<1x128xf32>
    tpu.vector_store %arg3[%c0_9, %c0_10], %23 {strides = array<i32>} : memref<1x128xf32, #tpu.memory_space<vmem>>, vector<1x128xf32>,
    return
  }
  func.func @transform_0(%arg0: i32) -> (i32, i32) {
    %c0_i32 = arith.constant 0 : i32
    %c0_i32_0 = arith.constant 0 : i32
    return %c0_i32, %arg0 : i32, i32
  }
  func.func @transform_1(%arg0: i32) -> (i32, i32) {
    %c0_i32 = arith.constant 0 : i32
    %c0_i32_0 = arith.constant 0 : i32
    return %c0_i32, %arg0 : i32, i32
  }
  func.func @transform_2(%arg0: i32) -> (i32, i32) {
    %c0_i32 = arith.constant 0 : i32
    %c0_i32_0 = arith.constant 0 : i32
    return %c0_i32, %arg0 : i32, i32
  }
}

</mosaic_0001>

<llo_original>
// kernel: forward.1
$region0: #{forward.1}
  #allocation0 [shape = 'u32[]', space=smem, size = 0x4, offset = 0x4, fixed_abs, tag = 'smem constant byte address 0x4 - core index']
  #allocation1 [shape = 'u32[72,128]{1,0:T(1,128)}', space=vmem, size = 0x9000, scoped, tag = 'internal scratch']
  %s0 = inlined_call_operand.vmem [shape: f32[2,128], index: 0, kind: input, shape index: {}]
  %s1 = inlined_call_operand.vmem [shape: f32[128,128], index: 1, kind: input, shape index: {}]
  %s2 = inlined_call_operand.vmem [shape: f32[1,128], index: 2, kind: output, shape index: {}]
  %s3 = sld [smem:[#allocation0]]
  $region18: #{forward.1} parent=0
    _
  %s5 = ssub.s32 1, %s3
  %s6 = scalar_select 0, %s5, %s3
  // Predicated region
  $region2: #{forward.1} parent=0 // pred_check
    _
  $region3: #{forward.1} parent=0 // pred_check_branch
    %8 = sbr.rel (0) target = $region5
  $region4: #{forward.1} parent=0 // pred_region
    _
  $region5: #{forward.1} parent=0 // pred_fallthru
    _
  // Predicated region
  $region6: #{forward.1} parent=0 // pred_check
    _
  $region7: #{forward.1} parent=0 // pred_check_branch
    %10 = sbr.rel (0) target = $region9
  $region8: #{forward.1} parent=0 // pred_region
    _
  $region9: #{forward.1} parent=0 // pred_fallthru
    _
  %v11 = vld [vmem:[%s0] sm:$0x1]
  %v12 = vld [vmem:[%s0 + $0x1] sm:$0x1]
  %v13 = vld [vmem:[%s1] sm:$0xff]
  %v14 = vld [vmem:[%s1 + $0x8] sm:$0xff]
  %v15 = vld [vmem:[%s1 + $0x10] sm:$0xff]
  %v16 = vld [vmem:[%s1 + $0x18] sm:$0xff]
  %v17 = vld [vmem:[%s1 + $0x20] sm:$0xff]
  %v18 = vld [vmem:[%s1 + $0x28] sm:$0xff]
  %v19 = vld [vmem:[%s1 + $0x30] sm:$0xff]
  %v20 = vld [vmem:[%s1 + $0x38] sm:$0xff]
  %v21 = vld [vmem:[%s1 + $0x40] sm:$0xff]
  %v22 = vld [vmem:[%s1 + $0x48] sm:$0xff]
  %v23 = vld [vmem:[%s1 + $0x50] sm:$0xff]
  %v24 = vld [vmem:[%s1 + $0x58] sm:$0xff]
  %v25 = vld [vmem:[%s1 + $0x60] sm:$0xff]
  %v26 = vld [vmem:[%s1 + $0x68] sm:$0xff]
  %v27 = vld [vmem:[%s1 + $0x70] sm:$0xff]
  %v28 = vld [vmem:[%s1 + $0x78] sm:$0xff]
  %v29 = vperm.slane %v11, 0
  %v30 = vsub.f32 %v29, %v13
  %v31 = vsub.f32 %v29, %v14
  %v32 = vsub.f32 %v29, %v15
  %v33 = vsub.f32 %v29, %v16
  %v34 = vmul.f32 %v30, %v21
  %v35 = vmul.f32 %v31, %v22
  %v36 = vmul.f32 %v32, %v23
  %v37 = vmul.f32 %v33, %v24
  %v38 = vperm.slane %v12, 0
  %v39 = vsub.f32 %v38, %v17
  %v40 = vsub.f32 %v38, %v18
  %v41 = vsub.f32 %v38, %v19
  %v42 = vsub.f32 %v38, %v20
  %v43 = vmul.f32 %v39, %v21
  %v44 = vmul.f32 %v40, %v22
  %v45 = vmul.f32 %v41, %v23
  %v46 = vmul.f32 %v42, %v24
  %v47 = vmul.f32 %v34, %v34
  %v48 = vmul.f32 %v35, %v35
  %v49 = vmul.f32 %v36, %v36
  %v50 = vmul.f32 %v37, %v37
  %v51 = vmul.f32 %v43, %v43
  %v52 = vmul.f32 %v44, %v44
  %v53 = vmul.f32 %v45, %v45
  %v54 = vmul.f32 %v46, %v46
  %v55 = vadd.f32 %v47, %v51
  %v56 = vadd.f32 %v48, %v52
  %v57 = vadd.f32 %v49, %v53
  %v58 = vadd.f32 %v50, %v54
  %v59 = vsub.f32 0.0, %v55
  %v60 = vsub.f32 0.0, %v56
  %v61 = vsub.f32 0.0, %v57
  %v62 = vsub.f32 0.0, %v58
  %v63 = vmul.f32 %v59, 1.442695
  %v64 = vpow.pop %v63
  %v65 = vmul.f32 %v60, 1.442695
  %v66 = vpow.pop %v65
  %v67 = vmul.f32 %v61, 1.442695
  %v68 = vpow.pop %v67
  %v69 = vmul.f32 %v62, 1.442695
  %v70 = vpow.pop %v69
  %v71 = vmul.f32 %v25, %v64
  %v72 = vmul.f32 %v26, %v66
  %v73 = vmul.f32 %v27, %v68
  %v74 = vmul.f32 %v28, %v70
  %v75 = vadd.f32 %v71, %v72
  %v76 = vadd.f32 %v75, %v73
  %v77 = vadd.f32 %v76, %v74
  %v78 = vrot.slane %v77, 4
  %v79 = vadd.f32 %v77, %v78
  %v80 = vrot.slane %v79, 2
  %v81 = vadd.f32 %v79, %v80
  %v82 = vrot.slane %v81, 1
  %v83 = vadd.f32 %v81, %v82
  %v84 = vadd.f32 %v64, %v66
  %v85 = vadd.f32 %v84, %v68
  %v86 = vadd.f32 %v85, %v70
  %v87 = vrot.slane %v86, 4
  %v88 = vadd.f32 %v86, %v87
  %v89 = vrot.slane %v88, 2
  %v90 = vadd.f32 %v88, %v89
  %v91 = vrot.slane %v90, 1
  %v92 = vadd.f32 %v90, %v91
  %v93 = vrcp.pop %v92
  %v94 = vmul.f32 %v92, %v93
  %v95 = vsub.f32 1.0, %v94
  %v96 = vmul.f32 %v93, %v95
  %v97 = vadd.f32 %v93, %v96
  %vm98 = vweird.f32 %v92
  %vm99 = vweird.f32 %v93
  %vm100 = vmor %vm98, %vm99
  %v101 = vsel %vm100, %v93, %v97
  %v102 = vand.u32 2147483647, %v92
  %vm103 = vcmp.eq.f32.partialorder %v102, 8.507059e+37
  %v104 = vand.u32 %v92, 2147483648
  %v105 = vor.u32 1.1754944e-38, %v104
  %v106 = vsel %vm103, %v105, %v101
  %v107 = vmul.f32 %v83, %v106
  %108 = vst [vmem:[%s2] sm:$0x1] %v107
  // Predicated region
  $region10: #{forward.1} parent=0 // pred_check
    _
  $region11: #{forward.1} parent=0 // pred_check_branch
    %110 = sbr.rel (0) target = $region13
  $region12: #{forward.1} parent=0 // pred_region
    _
  $region13: #{forward.1} parent=0 // pred_fallthru
    _
  // Predicated region
  $region14: #{forward.1} parent=0 // pred_check
    _
  $region15: #{forward.1} parent=0 // pred_check_branch
    %112 = sbr.rel (0) target = $region17
  $region16: #{forward.1} parent=0 // pred_region
    _
  $region17: #{forward.1} parent=0 // pred_fallthru
    _

</llo_original>
